<compile_context>
chip_gen: v7x
topology: tpu7x:2x2x1
jax: 0.10.0
libtpu: 0.0.40
codegen_flags: <defaults>
</compile_context>

<pallas_src>
import jax
import jax.numpy as jnp
from jax.experimental import pallas as pl
from jax.experimental.pallas import tpu as pltpu


def _make_divisible(ch, divisor=8, min_ch=None):
    if min_ch is None:
        min_ch = divisor
    new_ch = max(min_ch, int(ch + divisor / 2) // divisor * divisor)
    if new_ch < 0.9 * ch:
        new_ch += divisor
    return new_ch


def _round_up(x, m):
    return ((x + m - 1) // m) * m


def _padded_vmem_bytes(rows, cols, itemsize):
    """VMEM footprint of a 2-D buffer: sublanes padded to 8*(4/itemsize), lanes to 128."""
    sub = 8 * max(1, 4 // itemsize)
    return _round_up(rows, sub) * _round_up(cols, 128) * itemsize


def _vmem_budgets():
    """(live-block budget, vmem_limit_bytes) derived from this generation's VMEM.

    v5e/v6e (128 MiB physical): ~48 MiB of blocks, 96 MiB scoped limit.
    v7x     ( 64 MiB physical): ~24 MiB of blocks, 48 MiB scoped limit.
    """
    cap = 64 << 20  # conservative default (v7x per-core VMEM) if the query fails
    try:
        cap = int(pltpu.get_tpu_info().vmem_capacity_bytes)
    except Exception:
        pass
    block_budget = (3 * cap) // 8
    vmem_limit = max(32 << 20, min(cap - (16 << 20), (3 * cap) // 4))
    return block_budget, int(vmem_limit)


def _pick_batch_tile(n, chw, itemsize, resident_bytes, budget_bytes, min_steps=4):
    """Largest (8,128)-friendly batch tile whose double-buffered in+out blocks fit."""
    sub = 8 * max(1, 4 // itemsize)              # sublane packing: f32->8, bf16->16, i8->32
    row_bytes = _round_up(chw, 128) * itemsize   # padded lane footprint of one sample
    avail = max(0, budget_bytes - resident_bytes)
    nb_vmem = avail // (2 * 2 * row_bytes)       # (in + out) x double-buffer
    # Keep >= min_steps grid steps: amortizes the ~0.35us/step overhead while still
    # giving the software pipeline (and v7x's two TensorCores) work to overlap.
    nb = min(n, nb_vmem, max(1, pl.cdiv(n, min_steps)))
    if nb < n:
        # (8,128) rule: a partial block's second-minor dim must be a multiple of the
        # sublane packing (a full-extent block is always legal).
        nb = (nb // sub) * sub
        if nb == 0:
            nb = n if n <= sub else sub
    return int(max(1, min(nb, n)))


def _se_kernel(x_ref, pool_ref, expand_ref, w1t_ref, b1_ref, w2t_ref, b2_ref, o_ref):
    # x_ref / o_ref: (Nb, C*HW)          pool_ref:   (C*HW, C)  block-ones * (1/HW)
    # expand_ref:    (C, C*HW) block-ones
    # w1t_ref: (C, S)   b1_ref: (1, S)   w2t_ref: (S, C)   b2_ref: (1, C)

    # adaptive_avg_pool2d(x, (1,1)) == per-channel spatial mean, computed as an MXU
    # matmul against a (1/HW)-scaled block-ones matrix (MXU is otherwise idle; keeps
    # the segmented lane-reduce off the XLU).
    pooled = jnp.dot(x_ref[...], pool_ref[...],
                     preferred_element_type=jnp.float32)              # (Nb, C)

    # fc1 (1x1 conv == matmul) + ReLU
    s = jnp.dot(pooled, w1t_ref[...],
                preferred_element_type=jnp.float32) + b1_ref[...]     # (Nb, S)
    s = jnp.maximum(s, 0.0)

    # fc2 (1x1 conv == matmul) + hardsigmoid: clip((x+3)/6, 0, 1)
    s = jnp.dot(s, w2t_ref[...],
                preferred_element_type=jnp.float32) + b2_ref[...]     # (Nb, C)
    s = jnp.clip((s + 3.0) * (1.0 / 6.0), 0.0, 1.0)

    # Broadcast the per-channel gate across the HW lanes with a second MXU matmul
    # (avoids a sublane->lane relayout from reshape/broadcast), then scale.
    # x_ref is re-read here so no block-sized vreg live range spans the matmuls.
    gate = jnp.dot(s, expand_ref[...],
                   preferred_element_type=jnp.float32)                # (Nb, C*HW)
    o_ref[...] = x_ref[...] * gate.astype(o_ref.dtype)


def squeeze_excitation(x_nchw, w1, b1, w2, b2):
    """x_nchw: (N, C, H, W); w1: (S, C); b1: (S,); w2: (C, S); b2: (C,)."""
    N, C, H, W = x_nchw.shape
    S = w1.shape[0]
    HW = H * W
    CHW = C * HW
    dtype = x_nchw.dtype
    itemsize = jnp.dtype(dtype).itemsize

    # Lane-dense slab: NCHW is row-major so this reshape is free.
    x2d = x_nchw.reshape(N, CHW)

    # Block-ones matrices for the per-channel pool / per-channel gate broadcast.
    eye = jnp.eye(C, dtype=jnp.float32)
    pool_mat = (jnp.repeat(eye, HW, axis=0) * (1.0 / HW)).astype(dtype)   # (CHW, C)
    expand_mat = jnp.repeat(eye, HW, axis=1)                              # (C, CHW)

    w1t = w1.astype(jnp.float32).T              # (C, S)
    w2t = w2.astype(jnp.float32).T              # (S, C)
    b1r = b1.astype(jnp.float32).reshape(1, S)
    b2r = b2.astype(jnp.float32).reshape(1, C)

    # VMEM-resident (constant index_map) operands: counted padded and double-buffered
    # when sizing the streamed batch tile.
    resident = 2 * (_padded_vmem_bytes(CHW, C, itemsize)
                    + _padded_vmem_bytes(C, CHW, 4)
                    + _padded_vmem_bytes(C, S, 4)
                    + _padded_vmem_bytes(1, S, 4)
                    + _padded_vmem_bytes(S, C, 4)
                    + _padded_vmem_bytes(1, C, 4))
    block_budget, vmem_limit = _vmem_budgets()
    Nb = _pick_batch_tile(N, CHW, itemsize, resident, block_budget)
    grid = (pl.cdiv(N, Nb),)

    # Memory-bound op: tell XLA's scheduler roughly how heavy it is.
    cost = pl.CostEstimate(
        flops=int(2 * N * CHW * C          # pool matmul
                  + 2 * N * C * S          # fc1
                  + 2 * N * S * C          # fc2
                  + 2 * N * C * CHW        # gate-broadcast matmul
                  + N * CHW),              # elementwise scale
        transcendentals=0,
        bytes_accessed=int(2 * N * CHW * itemsize
                           + CHW * C * itemsize
                           + (C * CHW + C * S + S + S * C + C) * 4),
    )

    out = pl.pallas_call(
        _se_kernel,
        out_shape=jax.ShapeDtypeStruct((N, CHW), dtype),
        grid=grid,
        in_specs=[
            pl.BlockSpec((Nb, CHW), lambda n: (n, 0)),
            # Constant index_maps: DMA'd once, stay resident across grid steps.
            pl.BlockSpec((CHW, C), lambda n: (0, 0)),
            pl.BlockSpec((C, CHW), lambda n: (0, 0)),
            pl.BlockSpec((C, S), lambda n: (0, 0)),
            pl.BlockSpec((1, S), lambda n: (0, 0)),
            pl.BlockSpec((S, C), lambda n: (0, 0)),
            pl.BlockSpec((1, C), lambda n: (0, 0)),
        ],
        out_specs=pl.BlockSpec((Nb, CHW), lambda n: (n, 0)),
        compiler_params=pltpu.CompilerParams(
            # Batch axis is independent: pipelines DMA/compute and shards the grid
            # across both TensorCores on v7x.
            dimension_semantics=("parallel",),
            vmem_limit_bytes=vmem_limit),
        cost_estimate=cost,
    )(x2d, pool_mat, expand_mat, w1t, b1r, w2t, b2r)

    return out.reshape(N, C, H, W)


def squeeze_excitation_ref(x, w1, b1, w2, b2):
    """Pure-JAX reference matching the PyTorch forward (f32-accurate matmuls)."""
    hi = jax.lax.Precision.HIGHEST
    pooled = jnp.mean(x, axis=(2, 3))                                   # (N, C)
    s = jnp.maximum(jnp.dot(pooled, w1.T, precision=hi) + b1, 0.0)      # (N, S)
    s = jnp.dot(s, w2.T, precision=hi) + b2                             # (N, C)
    s = jnp.clip((s + 3.0) / 6.0, 0.0, 1.0)                             # hardsigmoid
    return x * s[:, :, None, None]


if __name__ == "__main__":
    # Shapes consistent with the module: input_c=16 -> squeeze_c=8.  Batch of 32 keeps
    # the problem small while exercising multiple (8,128)-aligned grid steps (Nb=8, 4 steps).
    N, C, H, W = 32, 16, 8, 8
    squeeze_factor = 4
    S = _make_divisible(C // squeeze_factor, 8)        # = 8

    key = jax.random.PRNGKey(0)
    kx, kw1, kb1, kw2, kb2 = jax.random.split(key, 5)

    x = jax.random.normal(kx, (N, C, H, W), dtype=jnp.float32)
    # 1x1 conv weights (out_c, in_c, 1, 1) -> stored as (out_c, in_c)
    w1 = 0.1 * jax.random.normal(kw1, (S, C), dtype=jnp.float32)
    b1 = 0.1 * jax.random.normal(kb1, (S,), dtype=jnp.float32)
    w2 = 0.1 * jax.random.normal(kw2, (C, S), dtype=jnp.float32)
    b2 = 0.1 * jax.random.normal(kb2, (C,), dtype=jnp.float32)

    out = squeeze_excitation(x, w1, b1, w2, b2)
    out = jax.block_until_ready(out)

    ref = squeeze_excitation_ref(x, w1, b1, w2, b2)
    assert out.shape == (N, C, H, W)
    assert jnp.allclose(out, ref, atol=2e-5, rtol=2e-5), "mismatch vs reference"

    print("KERNEL_OK")
</pallas_src>

<mosaic_0001>
module attributes {stable_mosaic.version = 11 : i64} {
  func.func @_se_kernel(%arg0: i32, %arg1: memref<8x1024xf32, #tpu.memory_space<vmem>>, %arg2: memref<1024x16xf32, #tpu.memory_space<vmem>>, %arg3: memref<16x1024xf32, #tpu.memory_space<vmem>>, %arg4: memref<16x8xf32, #tpu.memory_space<vmem>>, %arg5: memref<1x8xf32, #tpu.memory_space<vmem>>, %arg6: memref<8x16xf32, #tpu.memory_space<vmem>>, %arg7: memref<1x16xf32, #tpu.memory_space<vmem>>, %arg8: memref<8x1024xf32, #tpu.memory_space<vmem>>) attributes {dimension_semantics = [#tpu.dimension_semantics<parallel>], iteration_bounds = array<i64: 4>, scalar_prefetch = 0 : i64, scratch_operands = 0 : i64, tpu.core_type = #tpu.core_type<tc>, window_params = [{transform_indices = @transform_0, window_bounds = array<i64: 8, 1024>}, {pipeline_mode = #tpu.pipeline_mode<synchronous>, transform_indices = @transform_1, window_bounds = array<i64: 1024, 16>}, {pipeline_mode = #tpu.pipeline_mode<synchronous>, transform_indices = @transform_2, window_bounds = array<i64: 16, 1024>}, {pipeline_mode = #tpu.pipeline_mode<synchronous>, transform_indices = @transform_3, window_bounds = array<i64: 16, 8>}, {pipeline_mode = #tpu.pipeline_mode<synchronous>, transform_indices = @transform_4, window_bounds = array<i64: 1, 8>}, {pipeline_mode = #tpu.pipeline_mode<synchronous>, transform_indices = @transform_5, window_bounds = array<i64: 8, 16>}, {pipeline_mode = #tpu.pipeline_mode<synchronous>, transform_indices = @transform_6, window_bounds = array<i64: 1, 16>}, {transform_indices = @transform_7, window_bounds = array<i64: 8, 1024>}]} {
    %c0 = arith.constant 0 : index
    %c0_0 = arith.constant 0 : index
    %0 = vector.load %arg1[%c0, %c0_0] : memref<8x1024xf32, #tpu.memory_space<vmem>>, vector<8x1024xf32>
    %c0_1 = arith.constant 0 : index
    %c0_2 = arith.constant 0 : index
    %1 = vector.load %arg2[%c0_1, %c0_2] : memref<1024x16xf32, #tpu.memory_space<vmem>>, vector<1024x16xf32>
    %cst = arith.constant dense<0.000000e+00> : vector<8x16xf32>
    %2 = tpu.matmul %0, %1, %cst {dimension_numbers = #tpu.dot_dimension_numbers<[1], [0], [0], [1], [0, 0, 1, 1], [], []>} : vector<8x1024xf32>, vector<1024x16xf32>, vector<8x16xf32> -> vector<8x16xf32>
    %c0_3 = arith.constant 0 : index
    %c0_4 = arith.constant 0 : index
    %3 = vector.load %arg4[%c0_3, %c0_4] : memref<16x8xf32, #tpu.memory_space<vmem>>, vector<16x8xf32>
    %cst_5 = arith.constant dense<0.000000e+00> : vector<8x8xf32>
    %4 = tpu.matmul %2, %3, %cst_5 {dimension_numbers = #tpu.dot_dimension_numbers<[1], [0], [0], [1], [0, 0, 1, 1], [], []>} : vector<8x16xf32>, vector<16x8xf32>, vector<8x8xf32> -> vector<8x8xf32>
    %c0_6 = arith.constant 0 : index
    %c0_7 = arith.constant 0 : index
    %5 = vector.load %arg5[%c0_6, %c0_7] : memref<1x8xf32, #tpu.memory_space<vmem>>, vector<1x8xf32>
    %6 = vector.broadcast %5 : vector<1x8xf32> to vector<8x8xf32>
    %7 = arith.addf %4, %6 : vector<8x8xf32>
    %cst_8 = arith.constant 0.000000e+00 : f32
    %8 = vector.broadcast %cst_8 : f32 to vector<8x8xf32>
    %9 = arith.maximumf %7, %8 : vector<8x8xf32>
    %c0_9 = arith.constant 0 : index
    %c0_10 = arith.constant 0 : index
    %10 = vector.load %arg6[%c0_9, %c0_10] : memref<8x16xf32, #tpu.memory_space<vmem>>, vector<8x16xf32>
    %cst_11 = arith.constant dense<0.000000e+00> : vector<8x16xf32>
    %11 = tpu.matmul %9, %10, %cst_11 {dimension_numbers = #tpu.dot_dimension_numbers<[1], [0], [0], [1], [0, 0, 1, 1], [], []>} : vector<8x8xf32>, vector<8x16xf32>, vector<8x16xf32> -> vector<8x16xf32>
    %c0_12 = arith.constant 0 : index
    %c0_13 = arith.constant 0 : index
    %12 = vector.load %arg7[%c0_12, %c0_13] : memref<1x16xf32, #tpu.memory_space<vmem>>, vector<1x16xf32>
    %13 = vector.broadcast %12 : vector<1x16xf32> to vector<8x16xf32>
    %14 = arith.addf %11, %13 : vector<8x16xf32>
    %cst_14 = arith.constant 3.000000e+00 : f32
    %15 = vector.broadcast %cst_14 : f32 to vector<8x16xf32>
    %16 = arith.addf %14, %15 : vector<8x16xf32>
    %cst_15 = arith.constant 0.166666672 : f32
    %17 = vector.broadcast %cst_15 : f32 to vector<8x16xf32>
    %18 = arith.mulf %16, %17 : vector<8x16xf32>
    %cst_16 = arith.constant 0.000000e+00 : f32
    %cst_17 = arith.constant 1.000000e+00 : f32
    %19 = vector.broadcast %cst_16 : f32 to vector<8x16xf32>
    %20 = arith.maximumf %19, %18 : vector<8x16xf32>
    %21 = vector.broadcast %cst_17 : f32 to vector<8x16xf32>
    %22 = arith.minimumf %21, %20 : vector<8x16xf32>
    %c0_18 = arith.constant 0 : index
    %c0_19 = arith.constant 0 : index
    %23 = vector.load %arg3[%c0_18, %c0_19] : memref<16x1024xf32, #tpu.memory_space<vmem>>, vector<16x1024xf32>
    %cst_20 = arith.constant dense<0.000000e+00> : vector<8x1024xf32>
    %24 = tpu.matmul %22, %23, %cst_20 {dimension_numbers = #tpu.dot_dimension_numbers<[1], [0], [0], [1], [0, 0, 1, 1], [], []>} : vector<8x16xf32>, vector<16x1024xf32>, vector<8x1024xf32> -> vector<8x1024xf32>
    %c0_21 = arith.constant 0 : index
    %c0_22 = arith.constant 0 : index
    %25 = vector.load %arg1[%c0_21, %c0_22] : memref<8x1024xf32, #tpu.memory_space<vmem>>, vector<8x1024xf32>
    %26 = arith.mulf %25, %24 : vector<8x1024xf32>
    %c0_23 = arith.constant 0 : index
    %c0_24 = arith.constant 0 : index
    %27 = vector.load %arg8[%c0_23, %c0_24] : memref<8x1024xf32, #tpu.memory_space<vmem>>, vector<8x1024xf32>
    tpu.vector_store %arg8[%c0_23, %c0_24], %26 {strides = array<i32>} : memref<8x1024xf32, #tpu.memory_space<vmem>>, vector<8x1024xf32>,
    return
  }
  func.func @transform_0(%arg0: i32) -> (i32, i32) {
    %c0_i32 = arith.constant 0 : i32
    %c0_i32_0 = arith.constant 0 : i32
    return %arg0, %c0_i32 : i32, i32
  }
  func.func @transform_1(%arg0: i32) -> (i32, i32) {
    %c0_i32 = arith.constant 0 : i32
    %c0_i32_0 = arith.constant 0 : i32
    %c0_i32_1 = arith.constant 0 : i32
    return %c0_i32, %c0_i32_0 : i32, i32
  }
  func.func @transform_2(%arg0: i32) -> (i32, i32) {
    %c0_i32 = arith.constant 0 : i32
    %c0_i32_0 = arith.constant 0 : i32
    %c0_i32_1 = arith.constant 0 : i32
    return %c0_i32, %c0_i32_0 : i32, i32
  }
  func.func @transform_3(%arg0: i32) -> (i32, i32) {
    %c0_i32 = arith.constant 0 : i32
    %c0_i32_0 = arith.constant 0 : i32
    %c0_i32_1 = arith.constant 0 : i32
    return %c0_i32, %c0_i32_0 : i32, i32
  }
  func.func @transform_4(%arg0: i32) -> (i32, i32) {
    %c0_i32 = arith.constant 0 : i32
    %c0_i32_0 = arith.constant 0 : i32
    %c0_i32_1 = arith.constant 0 : i32
    return %c0_i32, %c0_i32_0 : i32, i32
  }
  func.func @transform_5(%arg0: i32) -> (i32, i32) {
    %c0_i32 = arith.constant 0 : i32
    %c0_i32_0 = arith.constant 0 : i32
    %c0_i32_1 = arith.constant 0 : i32
    return %c0_i32, %c0_i32_0 : i32, i32
  }
  func.func @transform_6(%arg0: i32) -> (i32, i32) {
    %c0_i32 = arith.constant 0 : i32
    %c0_i32_0 = arith.constant 0 : i32
    %c0_i32_1 = arith.constant 0 : i32
    return %c0_i32, %c0_i32_0 : i32, i32
  }
  func.func @transform_7(%arg0: i32) -> (i32, i32) {
    %c0_i32 = arith.constant 0 : i32
    %c0_i32_0 = arith.constant 0 : i32
    return %arg0, %c0_i32 : i32, i32
  }
}

</mosaic_0001>

<llo_original>
// kernel: tpu_custom_call.1
$region0: #{tpu_custom_call.1}
  #allocation0 [shape = 'u32[]', space=smem, size = 0x4, offset = 0x4, fixed_abs, tag = 'smem constant byte address 0x4 - core index']
  #allocation1 [shape = 'u32[144,128]{1,0:T(1,128)}', space=vmem, size = 0x12000, scoped, tag = 'internal scratch']
  %s0 = inlined_call_operand.vmem [shape: f32[32,1024], index: 0, kind: input, shape index: {}]
  %s1 = inlined_call_operand.vmem [shape: f32[1024,16], index: 1, kind: input, shape index: {}]
  %s2 = inlined_call_operand.vmem [shape: f32[16,1024], index: 2, kind: input, shape index: {}]
  %s3 = inlined_call_operand.vmem [shape: f32[16,8], index: 3, kind: input, shape index: {}]
  %s4 = inlined_call_operand.vmem [shape: f32[1,8], index: 4, kind: input, shape index: {}]
  %s5 = inlined_call_operand.vmem [shape: f32[8,16], index: 5, kind: input, shape index: {}]
  %s6 = inlined_call_operand.vmem [shape: f32[1,16], index: 6, kind: input, shape index: {}]
  %s7 = inlined_call_operand.hbm [shape: f32[32,1024], index: 7, kind: output, shape index: {}]
  %s8 = sld [smem:[#allocation0]]
  $region61: #{tpu_custom_call.1} parent=0
    _
  %s10 = ssub.s32 1, %s8
  %s11 = scalar_select 0, %s10, %s8
  $region1: #{tpu_custom_call.1} parent=0
    #allocation2 [shape = 'u8[65536]{0}', space=vmem, size = 0x10000, scoped, tag = 'output window, operand 0']
    #allocation3 [shape = 's32[2]{0}', space=sflag, size = 0x8, scoped, tag = 'scoped memory for tpu_custom_call.1']
    %12 = vsyncpa [#allocation3], 0
    %s13 = scalar_lea.sflag [#allocation3], 1
    %14 = vsyncpa %s13, 0
    loop: start=0, step=1, limit=6
    $region2: #{tpu_custom_call.1} parent=1 // loop_pre_header
      _
    $region3: #{tpu_custom_call.1} parent=1 // loop_header
      %s16 = sphi 0, %s20
      %p17 = scmp.ge.s32.totalorder %s16, 6
      %s26 = sphi 0, %s28
      %s29 = sphi 0, %s26
      %s30 = sphi 0, %s29
      %s46 = sphi 0, %s30
      %s50 = sphi 0, %s50
      %s52 = sphi 0, %s50
      %s53 = sphi 0, %s52
      %s67 = sphi 0, %s53
      %s71 = sphi 0, %s71
      %s73 = sphi 0, %s71
      %s74 = sphi 0, %s73
      %s88 = sphi 0, %s74
      %s92 = sphi 0, %s92
      %s94 = sphi 0, %s92
      %s95 = sphi 0, %s94
      %s109 = sphi 0, %s95
      %s113 = sphi 0, %s113
      %s115 = sphi 0, %s113
      %s116 = sphi 0, %s115
      %s130 = sphi 0, %s116
      %s134 = sphi 0, %s134
      %s136 = sphi 0, %s134
      %s137 = sphi 0, %s136
      %s151 = sphi 0, %s137
      %s155 = sphi 0, %s155
      %s157 = sphi 0, %s155
      %s158 = sphi 0, %s157
      %s172 = sphi 0, %s158
      %s178 = sphi 0, %s180
      %s181 = sphi 0, %s178
      %s182 = sphi 0, %s181
      %s198 = sphi 0, %s182
    $region4: #{tpu_custom_call.1} parent=1 // loop_header_branch
      %19 = sbr.rel (%p17) target = $region8
    $region5: #{tpu_custom_call.1} parent=1 // loop_body
      %s21 = ssub.s32 %s16, 1
      %s22 = ssub.s32 %s16, 2
      %s23 = sadd.s32 %s16, 1
      %s24 = ssub.s32 %s16, %s23
      %p25 = scmp.eq.s32.totalorder %s24, 0
      %s27 = sadd.s32 %s26, 1
      %s28 = scalar_select %p25, %s26, %s27
      %p31 = pneg %p25
      %p32 = scmp.eq.s32.totalorder %s16, 3
      %p33 = por %p31, %p32
      %p34 = scmp.ne.s32.totalorder %s26, %s29
      %p35 = scmp.eq.s32.totalorder %s16, 0
      %p36 = por %p34, %p35
      %p37 = scmp.ne.s32.totalorder %s26, %s29
      %p38 = scmp.eq.s32.totalorder %s21, 3
      %p39 = por %p37, %p38
      %p40 = scmp.ne.s32.totalorder %s29, %s30
      %p41 = scmp.eq.s32.totalorder %s21, 0
      %p42 = por %p40, %p41
      %p43 = scmp.ne.s32.totalorder %s29, %s30
      %p44 = scmp.eq.s32.totalorder %s22, 3
      %p45 = por %p43, %p44
      %p47 = scmp.ne.s32.totalorder %s30, %s46
      %p48 = scmp.eq.s32.totalorder %s22, 0
      %p49 = por %p47, %p48
      %s51 = sadd.s32 %s50, 1
      %p54 = scmp.eq.s32.totalorder %s16, 3
      %p55 = scmp.ne.s32.totalorder %s50, %s52
      %p56 = scmp.eq.s32.totalorder %s16, 0
      %p57 = por %p55, %p56
      %p58 = scmp.ne.s32.totalorder %s50, %s52
      %p59 = scmp.eq.s32.totalorder %s21, 3
      %p60 = por %p58, %p59
      %p61 = scmp.ne.s32.totalorder %s52, %s53
      %p62 = scmp.eq.s32.totalorder %s21, 0
      %p63 = por %p61, %p62
      %p64 = scmp.ne.s32.totalorder %s52, %s53
      %p65 = scmp.eq.s32.totalorder %s22, 3
      %p66 = por %p64, %p65
      %p68 = scmp.ne.s32.totalorder %s53, %s67
      %p69 = scmp.eq.s32.totalorder %s22, 0
      %p70 = por %p68, %p69
      %s72 = sadd.s32 %s71, 1
      %p75 = scmp.eq.s32.totalorder %s16, 3
      %p76 = scmp.ne.s32.totalorder %s71, %s73
      %p77 = scmp.eq.s32.totalorder %s16, 0
      %p78 = por %p76, %p77
      %p79 = scmp.ne.s32.totalorder %s71, %s73
      %p80 = scmp.eq.s32.totalorder %s21, 3
      %p81 = por %p79, %p80
      %p82 = scmp.ne.s32.totalorder %s73, %s74
      %p83 = scmp.eq.s32.totalorder %s21, 0
      %p84 = por %p82, %p83
      %p85 = scmp.ne.s32.totalorder %s73, %s74
      %p86 = scmp.eq.s32.totalorder %s22, 3
      %p87 = por %p85, %p86
      %p89 = scmp.ne.s32.totalorder %s74, %s88
      %p90 = scmp.eq.s32.totalorder %s22, 0
      %p91 = por %p89, %p90
      %s93 = sadd.s32 %s92, 1
      %p96 = scmp.eq.s32.totalorder %s16, 3
      %p97 = scmp.ne.s32.totalorder %s92, %s94
      %p98 = scmp.eq.s32.totalorder %s16, 0
      %p99 = por %p97, %p98
      %p100 = scmp.ne.s32.totalorder %s92, %s94
      %p101 = scmp.eq.s32.totalorder %s21, 3
      %p102 = por %p100, %p101
      %p103 = scmp.ne.s32.totalorder %s94, %s95
      %p104 = scmp.eq.s32.totalorder %s21, 0
      %p105 = por %p103, %p104
      %p106 = scmp.ne.s32.totalorder %s94, %s95
      %p107 = scmp.eq.s32.totalorder %s22, 3
      %p108 = por %p106, %p107
      %p110 = scmp.ne.s32.totalorder %s95, %s109
      %p111 = scmp.eq.s32.totalorder %s22, 0
      %p112 = por %p110, %p111
      %s114 = sadd.s32 %s113, 1
      %p117 = scmp.eq.s32.totalorder %s16, 3
      %p118 = scmp.ne.s32.totalorder %s113, %s115
      %p119 = scmp.eq.s32.totalorder %s16, 0
      %p120 = por %p118, %p119
      %p121 = scmp.ne.s32.totalorder %s113, %s115
      %p122 = scmp.eq.s32.totalorder %s21, 3
      %p123 = por %p121, %p122
      %p124 = scmp.ne.s32.totalorder %s115, %s116
      %p125 = scmp.eq.s32.totalorder %s21, 0
      %p126 = por %p124, %p125
      %p127 = scmp.ne.s32.totalorder %s115, %s116
      %p128 = scmp.eq.s32.totalorder %s22, 3
      %p129 = por %p127, %p128
      %p131 = scmp.ne.s32.totalorder %s116, %s130
      %p132 = scmp.eq.s32.totalorder %s22, 0
      %p133 = por %p131, %p132
      %s135 = sadd.s32 %s134, 1
      %p138 = scmp.eq.s32.totalorder %s16, 3
      %p139 = scmp.ne.s32.totalorder %s134, %s136
      %p140 = scmp.eq.s32.totalorder %s16, 0
      %p141 = por %p139, %p140
      %p142 = scmp.ne.s32.totalorder %s134, %s136
      %p143 = scmp.eq.s32.totalorder %s21, 3
      %p144 = por %p142, %p143
      %p145 = scmp.ne.s32.totalorder %s136, %s137
      %p146 = scmp.eq.s32.totalorder %s21, 0
      %p147 = por %p145, %p146
      %p148 = scmp.ne.s32.totalorder %s136, %s137
      %p149 = scmp.eq.s32.totalorder %s22, 3
      %p150 = por %p148, %p149
      %p152 = scmp.ne.s32.totalorder %s137, %s151
      %p153 = scmp.eq.s32.totalorder %s22, 0
      %p154 = por %p152, %p153
      %s156 = sadd.s32 %s155, 1
      %p159 = scmp.eq.s32.totalorder %s16, 3
      %p160 = scmp.ne.s32.totalorder %s155, %s157
      %p161 = scmp.eq.s32.totalorder %s16, 0
      %p162 = por %p160, %p161
      %p163 = scmp.ne.s32.totalorder %s155, %s157
      %p164 = scmp.eq.s32.totalorder %s21, 3
      %p165 = por %p163, %p164
      %p166 = scmp.ne.s32.totalorder %s157, %s158
      %p167 = scmp.eq.s32.totalorder %s21, 0
      %p168 = por %p166, %p167
      %p169 = scmp.ne.s32.totalorder %s157, %s158
      %p170 = scmp.eq.s32.totalorder %s22, 3
      %p171 = por %p169, %p170
      %p173 = scmp.ne.s32.totalorder %s158, %s172
      %p174 = scmp.eq.s32.totalorder %s22, 0
      %p175 = por %p173, %p174
      %s176 = ssub.s32 %s16, %s23
      %p177 = scmp.eq.s32.totalorder %s176, 0
      %s179 = sadd.s32 %s178, 1
      %s180 = scalar_select %p177, %s178, %s179
      %p183 = pneg %p177
      %p184 = scmp.eq.s32.totalorder %s16, 3
      %p185 = por %p183, %p184
      %p186 = scmp.ne.s32.totalorder %s178, %s181
      %p187 = scmp.eq.s32.totalorder %s16, 0
      %p188 = por %p186, %p187
      %p189 = scmp.ne.s32.totalorder %s178, %s181
      %p190 = scmp.eq.s32.totalorder %s21, 3
      %p191 = por %p189, %p190
      %p192 = scmp.ne.s32.totalorder %s181, %s182
      %p193 = scmp.eq.s32.totalorder %s21, 0
      %p194 = por %p192, %p193
      %p195 = scmp.ne.s32.totalorder %s181, %s182
      %p196 = scmp.eq.s32.totalorder %s22, 3
      %p197 = por %p195, %p196
      %p199 = scmp.ne.s32.totalorder %s182, %s198
      %p200 = scmp.eq.s32.totalorder %s22, 0
      %p201 = por %p199, %p200
      %p202 = scmp.le.s32.totalorder 1, %s16
      %p203 = scmp.lt.s32.totalorder %s16, 5
      %p204 = pnand %p202, %p203
      %p205 = pneg %p204
      // Predicated region
      $region9: #{tpu_custom_call.1} parent=5 // pred_check
        _
      $region10: #{tpu_custom_call.1} parent=5 // pred_check_branch
        %207 = sbr.rel (%p204) target = $region12
      $region11: #{tpu_custom_call.1} parent=5 // pred_region
        %s208 = ssub.s32 %s16, 1
        // Predicated region
        $region13: #{tpu_custom_call.1} parent=11 // pred_check
          %p209 = pneg %p63
        $region14: #{tpu_custom_call.1} parent=11 // pred_check_branch
          %211 = sbr.rel (%p209) target = $region16
        $region15: #{tpu_custom_call.1} parent=11 // pred_region
          _
        $region16: #{tpu_custom_call.1} parent=11 // pred_fallthru
          _
        // Predicated region
        $region17: #{tpu_custom_call.1} parent=11 // pred_check
          %p212 = pneg %p84
        $region18: #{tpu_custom_call.1} parent=11 // pred_check_branch
          %214 = sbr.rel (%p212) target = $region20
        $region19: #{tpu_custom_call.1} parent=11 // pred_region
          _
        $region20: #{tpu_custom_call.1} parent=11 // pred_fallthru
          _
        // Predicated region
        $region21: #{tpu_custom_call.1} parent=11 // pred_check
          %p215 = pneg %p105
        $region22: #{tpu_custom_call.1} parent=11 // pred_check_branch
          %217 = sbr.rel (%p215) target = $region24
        $region23: #{tpu_custom_call.1} parent=11 // pred_region
          _
        $region24: #{tpu_custom_call.1} parent=11 // pred_fallthru
          _
        // Predicated region
        $region25: #{tpu_custom_call.1} parent=11 // pred_check
          %p218 = pneg %p126
        $region26: #{tpu_custom_call.1} parent=11 // pred_check_branch
          %220 = sbr.rel (%p218) target = $region28
        $region27: #{tpu_custom_call.1} parent=11 // pred_region
          _
        $region28: #{tpu_custom_call.1} parent=11 // pred_fallthru
          _
        // Predicated region
        $region29: #{tpu_custom_call.1} parent=11 // pred_check
          %p221 = pneg %p147
        $region30: #{tpu_custom_call.1} parent=11 // pred_check_branch
          %223 = sbr.rel (%p221) target = $region32
        $region31: #{tpu_custom_call.1} parent=11 // pred_region
          _
        $region32: #{tpu_custom_call.1} parent=11 // pred_fallthru
          _
        // Predicated region
        $region33: #{tpu_custom_call.1} parent=11 // pred_check
          %p224 = pneg %p168
        $region34: #{tpu_custom_call.1} parent=11 // pred_check_branch
          %226 = sbr.rel (%p224) target = $region36
        $region35: #{tpu_custom_call.1} parent=11 // pred_region
          _
        $region36: #{tpu_custom_call.1} parent=11 // pred_fallthru
          _
      $region12: #{tpu_custom_call.1} parent=5 // pred_fallthru
        _
      %p227 = scmp.lt.s32.totalorder %s16, 4
      // Predicated region
      $region37: #{tpu_custom_call.1} parent=5 // pred_check
        %p228 = pneg %p227
      $region38: #{tpu_custom_call.1} parent=5 // pred_check_branch
        %230 = sbr.rel (%p228) target = $region40
      $region39: #{tpu_custom_call.1} parent=5 // pred_region
        // Predicated region
        $region41: #{tpu_custom_call.1} parent=39 // pred_check
          %p231 = pneg %p36
        $region42: #{tpu_custom_call.1} parent=39 // pred_check_branch
          %233 = sbr.rel (%p231) target = $region44
        $region43: #{tpu_custom_call.1} parent=39 // pred_region
          %p234 = scmp.lt.s32.totalorder %s16, 3
          %s235 = scalar_select %p234, %s16, 3
          %s236 = smul.addr %s235, 8
          %s237 = smul.addr %s236, 8
          %s238 = scalar_lea.vmem %s0, %s237
        $region44: #{tpu_custom_call.1} parent=39 // pred_fallthru
          _
      $region40: #{tpu_custom_call.1} parent=5 // pred_fallthru
        _
      %p239 = scmp.le.s32.totalorder 1, %s16
      %p240 = scmp.lt.s32.totalorder %s16, 5
      %p241 = pnand %p239, %p240
      %p242 = pneg %p241
      // Predicated region
      $region45: #{tpu_custom_call.1} parent=5 // pred_check
        _
      $region46: #{tpu_custom_call.1} parent=5 // pred_check_branch
        %244 = sbr.rel (%p241) target = $region48
      $region47: #{tpu_custom_call.1} parent=5 // pred_region
        %s245 = ssub.s32 %s16, 1
        %p246 = scmp.lt.s32.totalorder %s21, 3
        %s247 = scalar_select %p246, %s21, 3
        %s248 = smul.addr %s247, 8
        %s249 = smul.addr %s248, 8
        %s250 = scalar_lea.vmem %s0, %s249
        %p251 = pneg %p42
        %p252 = pneg %p39
        %p253 = pneg %p63
        %p254 = pneg %p60
        %p255 = pneg %p84
        %p256 = pneg %p81
        %p257 = pneg %p105
        %p258 = pneg %p102
        %p259 = pneg %p126
        %p260 = pneg %p123
        %p261 = pneg %p147
        %p262 = pneg %p144
        %p263 = pneg %p168
        %p264 = pneg %p165
        %p265 = pneg %p194
        %p266 = pneg %p191
        %s267 = sand.u32 %s181, 1
        %s268 = scalar_lea.sflag [#allocation3], %s267
        %s269 = sand.u32 %s181, 1
        %s270 = smul.addr %s269, 64
        %s271 = scalar_lea.vmem [#allocation2], %s270
        %p272 = scmp.lt.s32.totalorder %s21, 3
        %s273 = scalar_select %p272, %s21, 3
        %s274 = smul.addr %s273, 8
        %s275 = smul.addr %s274, 8
        %s276 = scalar_lea.vmem %s0, %s275
        %v277 = vld [vmem:[%s276] sm:$0xff]
        %v278 = vld [vmem:[%s276 + $0x8] sm:$0xff]
        %v279 = vld [vmem:[%s276 + $0x10] sm:$0xff]
        %v280 = vld [vmem:[%s276 + $0x18] sm:$0xff]
        %v281 = vld [vmem:[%s276 + $0x20] sm:$0xff]
        %v282 = vld [vmem:[%s276 + $0x28] sm:$0xff]
        %v283 = vld [vmem:[%s276 + $0x30] sm:$0xff]
        %v284 = vld [vmem:[%s276 + $0x38] sm:$0xff]
        %v285 = vld [vmem:[%s1] sm:$0xff]
        %v286 = vld [vmem:[%s1 + $0x8] sm:$0xff]
        %v287 = vld [vmem:[%s1 + $0x10] sm:$0xff]
        %v288 = vld [vmem:[%s1 + $0x18] sm:$0xff]
        %v289 = vld [vmem:[%s1 + $0x20] sm:$0xff]
        %v290 = vld [vmem:[%s1 + $0x28] sm:$0xff]
        %v291 = vld [vmem:[%s1 + $0x30] sm:$0xff]
        %v292 = vld [vmem:[%s1 + $0x38] sm:$0xff]
        %v293 = vld [vmem:[%s1 + $0x40] sm:$0xff]
        %v294 = vld [vmem:[%s1 + $0x48] sm:$0xff]
        %v295 = vld [vmem:[%s1 + $0x50] sm:$0xff]
        %v296 = vld [vmem:[%s1 + $0x58] sm:$0xff]
        %v297 = vld [vmem:[%s1 + $0x60] sm:$0xff]
        %v298 = vld [vmem:[%s1 + $0x68] sm:$0xff]
        %v299 = vld [vmem:[%s1 + $0x70] sm:$0xff]
        %v300 = vld [vmem:[%s1 + $0x78] sm:$0xff]
        %v301 = vld [vmem:[%s1 + $0x80] sm:$0xff]
        %v302 = vld [vmem:[%s1 + $0x88] sm:$0xff]
        %v303 = vld [vmem:[%s1 + $0x90] sm:$0xff]
        %v304 = vld [vmem:[%s1 + $0x98] sm:$0xff]
        %v305 = vld [vmem:[%s1 + $0xa0] sm:$0xff]
        %v306 = vld [vmem:[%s1 + $0xa8] sm:$0xff]
        %v307 = vld [vmem:[%s1 + $0xb0] sm:$0xff]
        %v308 = vld [vmem:[%s1 + $0xb8] sm:$0xff]
        %v309 = vld [vmem:[%s1 + $0xc0] sm:$0xff]
        %v310 = vld [vmem:[%s1 + $0xc8] sm:$0xff]
        %v311 = vld [vmem:[%s1 + $0xd0] sm:$0xff]
        %v312 = vld [vmem:[%s1 + $0xd8] sm:$0xff]
        %v313 = vld [vmem:[%s1 + $0xe0] sm:$0xff]
        %v314 = vld [vmem:[%s1 + $0xe8] sm:$0xff]
        %v315 = vld [vmem:[%s1 + $0xf0] sm:$0xff]
        %v316 = vld [vmem:[%s1 + $0xf8] sm:$0xff]
        %v317 = vld [vmem:[%s1 + $0x100] sm:$0xff]
        %v318 = vld [vmem:[%s1 + $0x108] sm:$0xff]
        %v319 = vld [vmem:[%s1 + $0x110] sm:$0xff]
        %v320 = vld [vmem:[%s1 + $0x118] sm:$0xff]
        %v321 = vld [vmem:[%s1 + $0x120] sm:$0xff]
        %v322 = vld [vmem:[%s1 + $0x128] sm:$0xff]
        %v323 = vld [vmem:[%s1 + $0x130] sm:$0xff]
        %v324 = vld [vmem:[%s1 + $0x138] sm:$0xff]
        %v325 = vld [vmem:[%s1 + $0x140] sm:$0xff]
        %v326 = vld [vmem:[%s1 + $0x148] sm:$0xff]
        %v327 = vld [vmem:[%s1 + $0x150] sm:$0xff]
        %v328 = vld [vmem:[%s1 + $0x158] sm:$0xff]
        %v329 = vld [vmem:[%s1 + $0x160] sm:$0xff]
        %v330 = vld [vmem:[%s1 + $0x168] sm:$0xff]
        %v331 = vld [vmem:[%s1 + $0x170] sm:$0xff]
        %v332 = vld [vmem:[%s1 + $0x178] sm:$0xff]
        %v333 = vld [vmem:[%s1 + $0x180] sm:$0xff]
        %v334 = vld [vmem:[%s1 + $0x188] sm:$0xff]
        %v335 = vld [vmem:[%s1 + $0x190] sm:$0xff]
        %v336 = vld [vmem:[%s1 + $0x198] sm:$0xff]
        %v337 = vld [vmem:[%s1 + $0x1a0] sm:$0xff]
        %v338 = vld [vmem:[%s1 + $0x1a8] sm:$0xff]
        %v339 = vld [vmem:[%s1 + $0x1b0] sm:$0xff]
        %v340 = vld [vmem:[%s1 + $0x1b8] sm:$0xff]
        %v341 = vld [vmem:[%s1 + $0x1c0] sm:$0xff]
        %v342 = vld [vmem:[%s1 + $0x1c8] sm:$0xff]
        %v343 = vld [vmem:[%s1 + $0x1d0] sm:$0xff]
        %v344 = vld [vmem:[%s1 + $0x1d8] sm:$0xff]
        %v345 = vld [vmem:[%s1 + $0x1e0] sm:$0xff]
        %v346 = vld [vmem:[%s1 + $0x1e8] sm:$0xff]
        %v347 = vld [vmem:[%s1 + $0x1f0] sm:$0xff]
        %v348 = vld [vmem:[%s1 + $0x1f8] sm:$0xff]
        %v349 = vld [vmem:[%s1 + $0x200] sm:$0xff]
        %v350 = vld [vmem:[%s1 + $0x208] sm:$0xff]
        %v351 = vld [vmem:[%s1 + $0x210] sm:$0xff]
        %v352 = vld [vmem:[%s1 + $0x218] sm:$0xff]
        %v353 = vld [vmem:[%s1 + $0x220] sm:$0xff]
        %v354 = vld [vmem:[%s1 + $0x228] sm:$0xff]
        %v355 = vld [vmem:[%s1 + $0x230] sm:$0xff]
        %v356 = vld [vmem:[%s1 + $0x238] sm:$0xff]
        %v357 = vld [vmem:[%s1 + $0x240] sm:$0xff]
        %v358 = vld [vmem:[%s1 + $0x248] sm:$0xff]
        %v359 = vld [vmem:[%s1 + $0x250] sm:$0xff]
        %v360 = vld [vmem:[%s1 + $0x258] sm:$0xff]
        %v361 = vld [vmem:[%s1 + $0x260] sm:$0xff]
        %v362 = vld [vmem:[%s1 + $0x268] sm:$0xff]
        %v363 = vld [vmem:[%s1 + $0x270] sm:$0xff]
        %v364 = vld [vmem:[%s1 + $0x278] sm:$0xff]
        %v365 = vld [vmem:[%s1 + $0x280] sm:$0xff]
        %v366 = vld [vmem:[%s1 + $0x288] sm:$0xff]
        %v367 = vld [vmem:[%s1 + $0x290] sm:$0xff]
        %v368 = vld [vmem:[%s1 + $0x298] sm:$0xff]
        %v369 = vld [vmem:[%s1 + $0x2a0] sm:$0xff]
        %v370 = vld [vmem:[%s1 + $0x2a8] sm:$0xff]
        %v371 = vld [vmem:[%s1 + $0x2b0] sm:$0xff]
        %v372 = vld [vmem:[%s1 + $0x2b8] sm:$0xff]
        %v373 = vld [vmem:[%s1 + $0x2c0] sm:$0xff]
        %v374 = vld [vmem:[%s1 + $0x2c8] sm:$0xff]
        %v375 = vld [vmem:[%s1 + $0x2d0] sm:$0xff]
        %v376 = vld [vmem:[%s1 + $0x2d8] sm:$0xff]
        %v377 = vld [vmem:[%s1 + $0x2e0] sm:$0xff]
        %v378 = vld [vmem:[%s1 + $0x2e8] sm:$0xff]
        %v379 = vld [vmem:[%s1 + $0x2f0] sm:$0xff]
        %v380 = vld [vmem:[%s1 + $0x2f8] sm:$0xff]
        %v381 = vld [vmem:[%s1 + $0x300] sm:$0xff]
        %v382 = vld [vmem:[%s1 + $0x308] sm:$0xff]
        %v383 = vld [vmem:[%s1 + $0x310] sm:$0xff]
        %v384 = vld [vmem:[%s1 + $0x318] sm:$0xff]
        %v385 = vld [vmem:[%s1 + $0x320] sm:$0xff]
        %v386 = vld [vmem:[%s1 + $0x328] sm:$0xff]
        %v387 = vld [vmem:[%s1 + $0x330] sm:$0xff]
        %v388 = vld [vmem:[%s1 + $0x338] sm:$0xff]
        %v389 = vld [vmem:[%s1 + $0x340] sm:$0xff]
        %v390 = vld [vmem:[%s1 + $0x348] sm:$0xff]
        %v391 = vld [vmem:[%s1 + $0x350] sm:$0xff]
        %v392 = vld [vmem:[%s1 + $0x358] sm:$0xff]
        %v393 = vld [vmem:[%s1 + $0x360] sm:$0xff]
        %v394 = vld [vmem:[%s1 + $0x368] sm:$0xff]
        %v395 = vld [vmem:[%s1 + $0x370] sm:$0xff]
        %v396 = vld [vmem:[%s1 + $0x378] sm:$0xff]
        %v397 = vld [vmem:[%s1 + $0x380] sm:$0xff]
        %v398 = vld [vmem:[%s1 + $0x388] sm:$0xff]
        %v399 = vld [vmem:[%s1 + $0x390] sm:$0xff]
        %v400 = vld [vmem:[%s1 + $0x398] sm:$0xff]
        %v401 = vld [vmem:[%s1 + $0x3a0] sm:$0xff]
        %v402 = vld [vmem:[%s1 + $0x3a8] sm:$0xff]
        %v403 = vld [vmem:[%s1 + $0x3b0] sm:$0xff]
        %v404 = vld [vmem:[%s1 + $0x3b8] sm:$0xff]
        %v405 = vld [vmem:[%s1 + $0x3c0] sm:$0xff]
        %v406 = vld [vmem:[%s1 + $0x3c8] sm:$0xff]
        %v407 = vld [vmem:[%s1 + $0x3d0] sm:$0xff]
        %v408 = vld [vmem:[%s1 + $0x3d8] sm:$0xff]
        %v409 = vld [vmem:[%s1 + $0x3e0] sm:$0xff]
        %v410 = vld [vmem:[%s1 + $0x3e8] sm:$0xff]
        %v411 = vld [vmem:[%s1 + $0x3f0] sm:$0xff]
        %v412 = vld [vmem:[%s1 + $0x3f8] sm:$0xff]
        %413 = vmatprep.subr.mxu0 0.0
        %414 = vmatpush1.msra.mxu0 %v285
        %415 = vmatprep.subr.mxu0 0.0
        %416 = vmatpush1.msra.mxu0 %v286
        %417 = vmatprep.subr.mxu0 0.0
        %418 = vmatpush1.msra.mxu0 %v287
        %419 = vmatprep.subr.mxu0 0.0
        %420 = vmatpush1.msra.mxu0 %v288
        %421 = vmatprep.subr.mxu0 0.0
        %422 = vmatpush1.msra.mxu0 %v289
        %423 = vmatprep.subr.mxu0 0.0
        %424 = vmatpush1.msra.mxu0 %v290
        %425 = vmatprep.subr.mxu0 0.0
        %426 = vmatpush1.msra.mxu0 %v291
        %427 = vmatprep.subr.mxu0 0.0
        %428 = vmatpush1.msra.mxu0 %v292
        %429 = vmatprep.subr.mxu0 0.0
        %430 = vmatpush1.msra.mxu0 %v293
        %431 = vmatprep.subr.mxu0 0.0
        %432 = vmatpush1.msra.mxu0 %v294
        %433 = vmatprep.subr.mxu0 0.0
        %434 = vmatpush1.msra.mxu0 %v295
        %435 = vmatprep.subr.mxu0 0.0
        %436 = vmatpush1.msra.mxu0 %v296
        %437 = vmatprep.subr.mxu0 0.0
        %438 = vmatpush1.msra.mxu0 %v297
        %439 = vmatprep.subr.mxu0 0.0
        %440 = vmatpush1.msra.mxu0 %v298
        %441 = vmatprep.subr.mxu0 0.0
        %442 = vmatpush1.msra.mxu0 %v299
        %443 = vmatprep.subr.mxu0 0.0
        %444 = vmatpush1.msra.mxu0 %v300
        %445 = vmatprep.subr.mxu0 0.0
        %446 = vmatpush1.msra.mxu0 %v301
        %447 = vmatprep.subr.mxu0 0.0
        %448 = vmatpush1.msra.mxu0 %v302
        %449 = vmatprep.subr.mxu0 0.0
        %450 = vmatpush1.msra.mxu0 %v303
        %451 = vmatprep.subr.mxu0 0.0
        %452 = vmatpush1.msra.mxu0 %v304
        %453 = vmatprep.subr.mxu0 0.0
        %454 = vmatpush1.msra.mxu0 %v305
        %455 = vmatprep.subr.mxu0 0.0
        %456 = vmatpush1.msra.mxu0 %v306
        %457 = vmatprep.subr.mxu0 0.0
        %458 = vmatpush1.msra.mxu0 %v307
        %459 = vmatprep.subr.mxu0 0.0
        %460 = vmatpush1.msra.mxu0 %v308
        %461 = vmatprep.subr.mxu0 0.0
        %462 = vmatpush1.msra.mxu0 %v309
        %463 = vmatprep.subr.mxu0 0.0
        %464 = vmatpush1.msra.mxu0 %v310
        %465 = vmatprep.subr.mxu0 0.0
        %466 = vmatpush1.msra.mxu0 %v311
        %467 = vmatprep.subr.mxu0 0.0
        %468 = vmatpush1.msra.mxu0 %v312
        %469 = vmatprep.subr.mxu0 0.0
        %470 = vmatpush1.msra.mxu0 %v313
        %471 = vmatprep.subr.mxu0 0.0
        %472 = vmatpush1.msra.mxu0 %v314
        %473 = vmatprep.subr.mxu0 0.0
        %474 = vmatpush1.msra.mxu0 %v315
        %475 = vmatprep.subr.mxu0 0.0
        %476 = vmatpush1.msra.mxu0 %v316
        %477 = vmatprep.mubr.f32.mxu0 %v278
        %478 = vmatmul.mubr.f32.gmra.mrb[0].mxu0 %v277
        %v479 = vpop.f32.mrb[0].mxu0
        %v480 = vadd.f32 0.0, %v479
        %v481 = vpop.f32.mrb[0].mxu0
        %482 = vdwg.mxu0
        %483 = vmatprep.subr.mxu0 0.0
        %484 = vmatpush1.msra.mxu0 %v317
        %485 = vmatprep.subr.mxu0 0.0
        %486 = vmatpush1.msra.mxu0 %v318
        %487 = vmatprep.subr.mxu0 0.0
        %488 = vmatpush1.msra.mxu0 %v319
        %489 = vmatprep.subr.mxu0 0.0
        %490 = vmatpush1.msra.mxu0 %v320
        %491 = vmatprep.subr.mxu0 0.0
        %492 = vmatpush1.msra.mxu0 %v321
        %493 = vmatprep.subr.mxu0 0.0
        %494 = vmatpush1.msra.mxu0 %v322
        %495 = vmatprep.subr.mxu0 0.0
        %496 = vmatpush1.msra.mxu0 %v323
        %497 = vmatprep.subr.mxu0 0.0
        %498 = vmatpush1.msra.mxu0 %v324
        %499 = vmatprep.subr.mxu0 0.0
        %500 = vmatpush1.msra.mxu0 %v325
        %501 = vmatprep.subr.mxu0 0.0
        %502 = vmatpush1.msra.mxu0 %v326
        %503 = vmatprep.subr.mxu0 0.0
        %504 = vmatpush1.msra.mxu0 %v327
        %505 = vmatprep.subr.mxu0 0.0
        %506 = vmatpush1.msra.mxu0 %v328
        %507 = vmatprep.subr.mxu0 0.0
        %508 = vmatpush1.msra.mxu0 %v329
        %509 = vmatprep.subr.mxu0 0.0
        %510 = vmatpush1.msra.mxu0 %v330
        %511 = vmatprep.subr.mxu0 0.0
        %512 = vmatpush1.msra.mxu0 %v331
        %513 = vmatprep.subr.mxu0 0.0
        %514 = vmatpush1.msra.mxu0 %v332
        %515 = vmatprep.subr.mxu0 0.0
        %516 = vmatpush1.msra.mxu0 %v333
        %517 = vmatprep.subr.mxu0 0.0
        %518 = vmatpush1.msra.mxu0 %v334
        %519 = vmatprep.subr.mxu0 0.0
        %520 = vmatpush1.msra.mxu0 %v335
        %521 = vmatprep.subr.mxu0 0.0
        %522 = vmatpush1.msra.mxu0 %v336
        %523 = vmatprep.subr.mxu0 0.0
        %524 = vmatpush1.msra.mxu0 %v337
        %525 = vmatprep.subr.mxu0 0.0
        %526 = vmatpush1.msra.mxu0 %v338
        %527 = vmatprep.subr.mxu0 0.0
        %528 = vmatpush1.msra.mxu0 %v339
        %529 = vmatprep.subr.mxu0 0.0
        %530 = vmatpush1.msra.mxu0 %v340
        %531 = vmatprep.subr.mxu0 0.0
        %532 = vmatpush1.msra.mxu0 %v341
        %533 = vmatprep.subr.mxu0 0.0
        %534 = vmatpush1.msra.mxu0 %v342
        %535 = vmatprep.subr.mxu0 0.0
        %536 = vmatpush1.msra.mxu0 %v343
        %537 = vmatprep.subr.mxu0 0.0
        %538 = vmatpush1.msra.mxu0 %v344
        %539 = vmatprep.subr.mxu0 0.0
        %540 = vmatpush1.msra.mxu0 %v345
        %541 = vmatprep.subr.mxu0 0.0
        %542 = vmatpush1.msra.mxu0 %v346
        %543 = vmatprep.subr.mxu0 0.0
        %544 = vmatpush1.msra.mxu0 %v347
        %545 = vmatprep.subr.mxu0 0.0
        %546 = vmatpush1.msra.mxu0 %v348
        %547 = vmatprep.mubr.f32.mxu0 %v280
        %548 = vmatmul.mubr.f32.gmra.mrb[0].mxu0 %v279
        %v549 = vpop.f32.mrb[0].mxu0
        %v550 = vadd.f32 %v480, %v549
        %v551 = vpop.f32.mrb[0].mxu0
        %552 = vdwg.mxu0
        %553 = vmatprep.subr.mxu0 0.0
        %554 = vmatpush1.msra.mxu0 %v349
        %555 = vmatprep.subr.mxu0 0.0
        %556 = vmatpush1.msra.mxu0 %v350
        %557 = vmatprep.subr.mxu0 0.0
        %558 = vmatpush1.msra.mxu0 %v351
        %559 = vmatprep.subr.mxu0 0.0
        %560 = vmatpush1.msra.mxu0 %v352
        %561 = vmatprep.subr.mxu0 0.0
        %562 = vmatpush1.msra.mxu0 %v353
        %563 = vmatprep.subr.mxu0 0.0
        %564 = vmatpush1.msra.mxu0 %v354
        %565 = vmatprep.subr.mxu0 0.0
        %566 = vmatpush1.msra.mxu0 %v355
        %567 = vmatprep.subr.mxu0 0.0
        %568 = vmatpush1.msra.mxu0 %v356
        %569 = vmatprep.subr.mxu0 0.0
        %570 = vmatpush1.msra.mxu0 %v357
        %571 = vmatprep.subr.mxu0 0.0
        %572 = vmatpush1.msra.mxu0 %v358
        %573 = vmatprep.subr.mxu0 0.0
        %574 = vmatpush1.msra.mxu0 %v359
        %575 = vmatprep.subr.mxu0 0.0
        %576 = vmatpush1.msra.mxu0 %v360
        %577 = vmatprep.subr.mxu0 0.0
        %578 = vmatpush1.msra.mxu0 %v361
        %579 = vmatprep.subr.mxu0 0.0
        %580 = vmatpush1.msra.mxu0 %v362
        %581 = vmatprep.subr.mxu0 0.0
        %582 = vmatpush1.msra.mxu0 %v363
        %583 = vmatprep.subr.mxu0 0.0
        %584 = vmatpush1.msra.mxu0 %v364
        %585 = vmatprep.subr.mxu0 0.0
        %586 = vmatpush1.msra.mxu0 %v365
        %587 = vmatprep.subr.mxu0 0.0
        %588 = vmatpush1.msra.mxu0 %v366
        %589 = vmatprep.subr.mxu0 0.0
        %590 = vmatpush1.msra.mxu0 %v367
        %591 = vmatprep.subr.mxu0 0.0
        %592 = vmatpush1.msra.mxu0 %v368
        %593 = vmatprep.subr.mxu0 0.0
        %594 = vmatpush1.msra.mxu0 %v369
        %595 = vmatprep.subr.mxu0 0.0
        %596 = vmatpush1.msra.mxu0 %v370
        %597 = vmatprep.subr.mxu0 0.0
        %598 = vmatpush1.msra.mxu0 %v371
        %599 = vmatprep.subr.mxu0 0.0
        %600 = vmatpush1.msra.mxu0 %v372
        %601 = vmatprep.subr.mxu0 0.0
        %602 = vmatpush1.msra.mxu0 %v373
        %603 = vmatprep.subr.mxu0 0.0
        %604 = vmatpush1.msra.mxu0 %v374
        %605 = vmatprep.subr.mxu0 0.0
        %606 = vmatpush1.msra.mxu0 %v375
        %607 = vmatprep.subr.mxu0 0.0
        %608 = vmatpush1.msra.mxu0 %v376
        %609 = vmatprep.subr.mxu0 0.0
        %610 = vmatpush1.msra.mxu0 %v377
        %611 = vmatprep.subr.mxu0 0.0
        %612 = vmatpush1.msra.mxu0 %v378
        %613 = vmatprep.subr.mxu0 0.0
        %614 = vmatpush1.msra.mxu0 %v379
        %615 = vmatprep.subr.mxu0 0.0
        %616 = vmatpush1.msra.mxu0 %v380
        %617 = vmatprep.mubr.f32.mxu0 %v282
        %618 = vmatmul.mubr.f32.gmra.mrb[0].mxu0 %v281
        %v619 = vpop.f32.mrb[0].mxu0
        %v620 = vadd.f32 %v550, %v619
        %v621 = vpop.f32.mrb[0].mxu0
        %622 = vdwg.mxu0
        %623 = vmatprep.subr.mxu0 0.0
        %624 = vmatpush1.msra.mxu0 %v381
        %625 = vmatprep.subr.mxu0 0.0
        %626 = vmatpush1.msra.mxu0 %v382
        %627 = vmatprep.subr.mxu0 0.0
        %628 = vmatpush1.msra.mxu0 %v383
        %629 = vmatprep.subr.mxu0 0.0
        %630 = vmatpush1.msra.mxu0 %v384
        %631 = vmatprep.subr.mxu0 0.0
        %632 = vmatpush1.msra.mxu0 %v385
        %633 = vmatprep.subr.mxu0 0.0
        %634 = vmatpush1.msra.mxu0 %v386
        %635 = vmatprep.subr.mxu0 0.0
        %636 = vmatpush1.msra.mxu0 %v387
        %637 = vmatprep.subr.mxu0 0.0
        %638 = vmatpush1.msra.mxu0 %v388
        %639 = vmatprep.subr.mxu0 0.0
        %640 = vmatpush1.msra.mxu0 %v389
        %641 = vmatprep.subr.mxu0 0.0
        %642 = vmatpush1.msra.mxu0 %v390
        %643 = vmatprep.subr.mxu0 0.0
        %644 = vmatpush1.msra.mxu0 %v391
        %645 = vmatprep.subr.mxu0 0.0
        %646 = vmatpush1.msra.mxu0 %v392
        %647 = vmatprep.subr.mxu0 0.0
        %648 = vmatpush1.msra.mxu0 %v393
        %649 = vmatprep.subr.mxu0 0.0
        %650 = vmatpush1.msra.mxu0 %v394
        %651 = vmatprep.subr.mxu0 0.0
        %652 = vmatpush1.msra.mxu0 %v395
        %653 = vmatprep.subr.mxu0 0.0
        %654 = vmatpush1.msra.mxu0 %v396
        %655 = vmatprep.subr.mxu0 0.0
        %656 = vmatpush1.msra.mxu0 %v397
        %657 = vmatprep.subr.mxu0 0.0
        %658 = vmatpush1.msra.mxu0 %v398
        %659 = vmatprep.subr.mxu0 0.0
        %660 = vmatpush1.msra.mxu0 %v399
        %661 = vmatprep.subr.mxu0 0.0
        %662 = vmatpush1.msra.mxu0 %v400
        %663 = vmatprep.subr.mxu0 0.0
        %664 = vmatpush1.msra.mxu0 %v401
        %665 = vmatprep.subr.mxu0 0.0
        %666 = vmatpush1.msra.mxu0 %v402
        %667 = vmatprep.subr.mxu0 0.0
        %668 = vmatpush1.msra.mxu0 %v403
        %669 = vmatprep.subr.mxu0 0.0
        %670 = vmatpush1.msra.mxu0 %v404
        %671 = vmatprep.subr.mxu0 0.0
        %672 = vmatpush1.msra.mxu0 %v405
        %673 = vmatprep.subr.mxu0 0.0
        %674 = vmatpush1.msra.mxu0 %v406
        %675 = vmatprep.subr.mxu0 0.0
        %676 = vmatpush1.msra.mxu0 %v407
        %677 = vmatprep.subr.mxu0 0.0
        %678 = vmatpush1.msra.mxu0 %v408
        %679 = vmatprep.subr.mxu0 0.0
        %680 = vmatpush1.msra.mxu0 %v409
        %681 = vmatprep.subr.mxu0 0.0
        %682 = vmatpush1.msra.mxu0 %v410
        %683 = vmatprep.subr.mxu0 0.0
        %684 = vmatpush1.msra.mxu0 %v411
        %685 = vmatprep.subr.mxu0 0.0
        %686 = vmatpush1.msra.mxu0 %v412
        %687 = vmatprep.mubr.f32.mxu0 %v284
        %688 = vmatmul.mubr.f32.gmra.mrb[0].mxu0 %v283
        %v689 = vpop.f32.mrb[0].mxu0
        %v690 = vadd.f32 %v620, %v689
        %v691 = vpop.f32.mrb[0].mxu0
        %692 = vdwg.mxu0
        %v693 = vld [vmem:[%s3] sm:$0xff]
        %v694 = vld [vmem:[%s3 + $0x8] sm:$0xff]
        %v695 = vld [vmem:[%s4] sm:$0x1]
        %v697 = vlaneseq
        %v698 = vshrl.u32 %v697, 7
        %v699 = vsub.s32 0, %v698
        %v700 = vrot.slane %v695, %v699
        %vm702 = vcmask 130048
        %v704 = vsel %vm702, %v690, 0
        %706 = vmatprep.subr.mxu0 0.0
        %707 = vmatpush1.msra.mxu0 %v693
        %708 = vmatprep.subr.mxu0 0.0
        %709 = vmatpush1.msra.mxu0 %v694
        %710 = vmatprep.subr.mxu0 0.0
        %711 = vmatpush1.msra.mxu0 0.0
        %712 = vmatprep.subr.mxu0 0.0
        %713 = vmatpush1.msra.mxu0 0.0
        %714 = vmatprep.subr.mxu0 0.0
        %715 = vmatpush1.msra.mxu0 0.0
        %716 = vmatprep.subr.mxu0 0.0
        %717 = vmatpush1.msra.mxu0 0.0
        %718 = vmatprep.subr.mxu0 0.0
        %719 = vmatpush1.msra.mxu0 0.0
        %720 = vmatprep.subr.mxu0 0.0
        %721 = vmatpush1.msra.mxu0 0.0
        %722 = vmatprep.subr.mxu0 0.0
        %723 = vmatpush1.msra.mxu0 0.0
        %724 = vmatprep.subr.mxu0 0.0
        %725 = vmatpush1.msra.mxu0 0.0
        %726 = vmatprep.subr.mxu0 0.0
        %727 = vmatpush1.msra.mxu0 0.0
        %728 = vmatprep.subr.mxu0 0.0
        %729 = vmatpush1.msra.mxu0 0.0
        %730 = vmatprep.subr.mxu0 0.0
        %731 = vmatpush1.msra.mxu0 0.0
        %732 = vmatprep.subr.mxu0 0.0
        %733 = vmatpush1.msra.mxu0 0.0
        %734 = vmatprep.subr.mxu0 0.0
        %735 = vmatpush1.msra.mxu0 0.0
        %736 = vmatprep.subr.mxu0 0.0
        %737 = vmatpush1.msra.mxu0 0.0
        %738 = vmatprep.subr.mxu0 0.0
        %739 = vmatpush1.msra.mxu0 0.0
        %740 = vmatprep.subr.mxu0 0.0
        %741 = vmatpush1.msra.mxu0 0.0
        %742 = vmatprep.subr.mxu0 0.0
        %743 = vmatpush1.msra.mxu0 0.0
        %744 = vmatprep.subr.mxu0 0.0
        %745 = vmatpush1.msra.mxu0 0.0
        %746 = vmatprep.subr.mxu0 0.0
        %747 = vmatpush1.msra.mxu0 0.0
        %748 = vmatprep.subr.mxu0 0.0
        %749 = vmatpush1.msra.mxu0 0.0
        %750 = vmatprep.subr.mxu0 0.0
        %751 = vmatpush1.msra.mxu0 0.0
        %752 = vmatprep.subr.mxu0 0.0
        %753 = vmatpush1.msra.mxu0 0.0
        %754 = vmatprep.subr.mxu0 0.0
        %755 = vmatpush1.msra.mxu0 0.0
        %756 = vmatprep.subr.mxu0 0.0
        %757 = vmatpush1.msra.mxu0 0.0
        %758 = vmatprep.subr.mxu0 0.0
        %759 = vmatpush1.msra.mxu0 0.0
        %760 = vmatprep.subr.mxu0 0.0
        %761 = vmatpush1.msra.mxu0 0.0
        %762 = vmatprep.subr.mxu0 0.0
        %763 = vmatpush1.msra.mxu0 0.0
        %764 = vmatprep.subr.mxu0 0.0
        %765 = vmatpush1.msra.mxu0 0.0
        %766 = vmatprep.subr.mxu0 0.0
        %767 = vmatpush1.msra.mxu0 0.0
        %768 = vmatprep.subr.mxu0 0.0
        %769 = vmatpush1.msra.mxu0 0.0
        %770 = vmatprep.mubr.f32.mxu0 0.0
        %771 = vmatmul.mubr.f32.gmra.mrb[0].mxu0 %v704
        %v772 = vpop.f32.mrb[0].mxu0
        %v773 = vadd.f32 %v700, %v772
        %v774 = vpop.f32.mrb[0].mxu0
        %775 = vdwg.mxu0
        %v776 = vmax.f32 %v773, 0.0
        %v777 = vld [vmem:[%s5] sm:$0xff]
        %v778 = vld [vmem:[%s6] sm:$0x1]
        %v780 = vlaneseq
        %v781 = vshrl.u32 %v780, 7
        %v782 = vsub.s32 0, %v781
        %v783 = vrot.slane %v778, %v782
        %vm785 = vcmask 64512
        %v787 = vsel %vm785, %v776, 0
        %789 = vmatprep.subr.mxu0 0.0
        %790 = vmatpush1.msra.mxu0 %v777
        %791 = vmatprep.subr.mxu0 0.0
        %792 = vmatpush1.msra.mxu0 0.0
        %793 = vmatprep.subr.mxu0 0.0
        %794 = vmatpush1.msra.mxu0 0.0
        %795 = vmatprep.subr.mxu0 0.0
        %796 = vmatpush1.msra.mxu0 0.0
        %797 = vmatprep.subr.mxu0 0.0
        %798 = vmatpush1.msra.mxu0 0.0
        %799 = vmatprep.subr.mxu0 0.0
        %800 = vmatpush1.msra.mxu0 0.0
        %801 = vmatprep.subr.mxu0 0.0
        %802 = vmatpush1.msra.mxu0 0.0
        %803 = vmatprep.subr.mxu0 0.0
        %804 = vmatpush1.msra.mxu0 0.0
        %805 = vmatprep.subr.mxu0 0.0
        %806 = vmatpush1.msra.mxu0 0.0
        %807 = vmatprep.subr.mxu0 0.0
        %808 = vmatpush1.msra.mxu0 0.0
        %809 = vmatprep.subr.mxu0 0.0
        %810 = vmatpush1.msra.mxu0 0.0
        %811 = vmatprep.subr.mxu0 0.0
        %812 = vmatpush1.msra.mxu0 0.0
        %813 = vmatprep.subr.mxu0 0.0
        %814 = vmatpush1.msra.mxu0 0.0
        %815 = vmatprep.subr.mxu0 0.0
        %816 = vmatpush1.msra.mxu0 0.0
        %817 = vmatprep.subr.mxu0 0.0
        %818 = vmatpush1.msra.mxu0 0.0
        %819 = vmatprep.subr.mxu0 0.0
        %820 = vmatpush1.msra.mxu0 0.0
        %821 = vmatprep.subr.mxu0 0.0
        %822 = vmatpush1.msra.mxu0 0.0
        %823 = vmatprep.subr.mxu0 0.0
        %824 = vmatpush1.msra.mxu0 0.0
        %825 = vmatprep.subr.mxu0 0.0
        %826 = vmatpush1.msra.mxu0 0.0
        %827 = vmatprep.subr.mxu0 0.0
        %828 = vmatpush1.msra.mxu0 0.0
        %829 = vmatprep.subr.mxu0 0.0
        %830 = vmatpush1.msra.mxu0 0.0
        %831 = vmatprep.subr.mxu0 0.0
        %832 = vmatpush1.msra.mxu0 0.0
        %833 = vmatprep.subr.mxu0 0.0
        %834 = vmatpush1.msra.mxu0 0.0
        %835 = vmatprep.subr.mxu0 0.0
        %836 = vmatpush1.msra.mxu0 0.0
        %837 = vmatprep.subr.mxu0 0.0
        %838 = vmatpush1.msra.mxu0 0.0
        %839 = vmatprep.subr.mxu0 0.0
        %840 = vmatpush1.msra.mxu0 0.0
        %841 = vmatprep.subr.mxu0 0.0
        %842 = vmatpush1.msra.mxu0 0.0
        %843 = vmatprep.subr.mxu0 0.0
        %844 = vmatpush1.msra.mxu0 0.0
        %845 = vmatprep.subr.mxu0 0.0
        %846 = vmatpush1.msra.mxu0 0.0
        %847 = vmatprep.subr.mxu0 0.0
        %848 = vmatpush1.msra.mxu0 0.0
        %849 = vmatprep.subr.mxu0 0.0
        %850 = vmatpush1.msra.mxu0 0.0
        %851 = vmatprep.subr.mxu0 0.0
        %852 = vmatpush1.msra.mxu0 0.0
        %853 = vmatprep.mubr.f32.mxu0 0.0
        %854 = vmatmul.mubr.f32.gmra.mrb[0].mxu0 %v787
        %v855 = vpop.f32.mrb[0].mxu0
        %v856 = vadd.f32 %v783, %v855
        %v857 = vpop.f32.mrb[0].mxu0
        %858 = vdwg.mxu0
        %v859 = vadd.f32 %v856, 3.0
        %v860 = vmul.f32 %v859, 0.16666667
        %v861 = vmax.f32 %v860, 0.0
        %v862 = vmin.f32 %v861, 1.0
        %v863 = vld [vmem:[%s2] sm:$0xff]
        %v864 = vld [vmem:[%s2 + $0x8] sm:$0xff]
        %v865 = vld [vmem:[%s2 + $0x10] sm:$0xff]
        %v866 = vld [vmem:[%s2 + $0x18] sm:$0xff]
        %v867 = vld [vmem:[%s2 + $0x20] sm:$0xff]
        %v868 = vld [vmem:[%s2 + $0x28] sm:$0xff]
        %v869 = vld [vmem:[%s2 + $0x30] sm:$0xff]
        %v870 = vld [vmem:[%s2 + $0x38] sm:$0xff]
        %v871 = vld [vmem:[%s2 + $0x40] sm:$0xff]
        %v872 = vld [vmem:[%s2 + $0x48] sm:$0xff]
        %v873 = vld [vmem:[%s2 + $0x50] sm:$0xff]
        %v874 = vld [vmem:[%s2 + $0x58] sm:$0xff]
        %v875 = vld [vmem:[%s2 + $0x60] sm:$0xff]
        %v876 = vld [vmem:[%s2 + $0x68] sm:$0xff]
        %v877 = vld [vmem:[%s2 + $0x70] sm:$0xff]
        %v878 = vld [vmem:[%s2 + $0x78] sm:$0xff]
        %v880 = vsel %vm702, %v862, 0
        %882 = vmatprep.subr.mxu0 %v864
        %883 = vmatpush1.msra.mxu0 %v863
        %884 = vmatprep.subr.mxu0 %v872
        %885 = vmatpush1.msra.mxu0 %v871
        %886 = vmatprep.subr.mxu0 0.0
        %887 = vmatpush1.msra.mxu0 0.0
        %888 = vmatprep.subr.mxu0 0.0
        %889 = vmatpush1.msra.mxu0 0.0
        %890 = vmatprep.subr.mxu0 0.0
        %891 = vmatpush1.msra.mxu0 0.0
        %892 = vmatprep.subr.mxu0 0.0
        %893 = vmatpush1.msra.mxu0 0.0
        %894 = vmatprep.subr.mxu0 0.0
        %895 = vmatpush1.msra.mxu0 0.0
        %896 = vmatprep.subr.mxu0 0.0
        %897 = vmatpush1.msra.mxu0 0.0
        %898 = vmatprep.subr.mxu0 0.0
        %899 = vmatpush1.msra.mxu0 0.0
        %900 = vmatprep.subr.mxu0 0.0
        %901 = vmatpush1.msra.mxu0 0.0
        %902 = vmatprep.subr.mxu0 0.0
        %903 = vmatpush1.msra.mxu0 0.0
        %904 = vmatprep.subr.mxu0 0.0
        %905 = vmatpush1.msra.mxu0 0.0
        %906 = vmatprep.subr.mxu0 0.0
        %907 = vmatpush1.msra.mxu0 0.0
        %908 = vmatprep.subr.mxu0 0.0
        %909 = vmatpush1.msra.mxu0 0.0
        %910 = vmatprep.subr.mxu0 0.0
        %911 = vmatpush1.msra.mxu0 0.0
        %912 = vmatprep.subr.mxu0 0.0
        %913 = vmatpush1.msra.mxu0 0.0
        %914 = vmatprep.subr.mxu0 0.0
        %915 = vmatpush1.msra.mxu0 0.0
        %916 = vmatprep.subr.mxu0 0.0
        %917 = vmatpush1.msra.mxu0 0.0
        %918 = vmatprep.subr.mxu0 0.0
        %919 = vmatpush1.msra.mxu0 0.0
        %920 = vmatprep.subr.mxu0 0.0
        %921 = vmatpush1.msra.mxu0 0.0
        %922 = vmatprep.subr.mxu0 0.0
        %923 = vmatpush1.msra.mxu0 0.0
        %924 = vmatprep.subr.mxu0 0.0
        %925 = vmatpush1.msra.mxu0 0.0
        %926 = vmatprep.subr.mxu0 0.0
        %927 = vmatpush1.msra.mxu0 0.0
        %928 = vmatprep.subr.mxu0 0.0
        %929 = vmatpush1.msra.mxu0 0.0
        %930 = vmatprep.subr.mxu0 0.0
        %931 = vmatpush1.msra.mxu0 0.0
        %932 = vmatprep.subr.mxu0 0.0
        %933 = vmatpush1.msra.mxu0 0.0
        %934 = vmatprep.subr.mxu0 0.0
        %935 = vmatpush1.msra.mxu0 0.0
        %936 = vmatprep.subr.mxu0 0.0
        %937 = vmatpush1.msra.mxu0 0.0
        %938 = vmatprep.subr.mxu0 0.0
        %939 = vmatpush1.msra.mxu0 0.0
        %940 = vmatprep.subr.mxu0 0.0
        %941 = vmatpush1.msra.mxu0 0.0
        %942 = vmatprep.subr.mxu0 0.0
        %943 = vmatpush1.msra.mxu0 0.0
        %944 = vmatprep.subr.mxu0 0.0
        %945 = vmatpush1.msra.mxu0 0.0
        %946 = vmatprep.mubr.f32.mxu0 0.0
        %947 = vmatmul.mubr.f32.gmra.mrb[0].mxu0 %v880
        %v948 = vpop.f32.mrb[0].mxu0
        %v949 = vadd.f32 0.0, %v948
        %v950 = vpop.f32.mrb[0].mxu0
        %v951 = vadd.f32 0.0, %v950
        %952 = vdwg.mxu0
        %953 = vmatprep.subr.mxu0 %v866
        %954 = vmatpush1.msra.mxu0 %v865
        %955 = vmatprep.subr.mxu0 %v874
        %956 = vmatpush1.msra.mxu0 %v873
        %957 = vmatprep.subr.mxu0 0.0
        %958 = vmatpush1.msra.mxu0 0.0
        %959 = vmatprep.subr.mxu0 0.0
        %960 = vmatpush1.msra.mxu0 0.0
        %961 = vmatprep.subr.mxu0 0.0
        %962 = vmatpush1.msra.mxu0 0.0
        %963 = vmatprep.subr.mxu0 0.0
        %964 = vmatpush1.msra.mxu0 0.0
        %965 = vmatprep.subr.mxu0 0.0
        %966 = vmatpush1.msra.mxu0 0.0
        %967 = vmatprep.subr.mxu0 0.0
        %968 = vmatpush1.msra.mxu0 0.0
        %969 = vmatprep.subr.mxu0 0.0
        %970 = vmatpush1.msra.mxu0 0.0
        %971 = vmatprep.subr.mxu0 0.0
        %972 = vmatpush1.msra.mxu0 0.0
        %973 = vmatprep.subr.mxu0 0.0
        %974 = vmatpush1.msra.mxu0 0.0
        %975 = vmatprep.subr.mxu0 0.0
        %976 = vmatpush1.msra.mxu0 0.0
        %977 = vmatprep.subr.mxu0 0.0
        %978 = vmatpush1.msra.mxu0 0.0
        %979 = vmatprep.subr.mxu0 0.0
        %980 = vmatpush1.msra.mxu0 0.0
        %981 = vmatprep.subr.mxu0 0.0
        %982 = vmatpush1.msra.mxu0 0.0
        %983 = vmatprep.subr.mxu0 0.0
        %984 = vmatpush1.msra.mxu0 0.0
        %985 = vmatprep.subr.mxu0 0.0
        %986 = vmatpush1.msra.mxu0 0.0
        %987 = vmatprep.subr.mxu0 0.0
        %988 = vmatpush1.msra.mxu0 0.0
        %989 = vmatprep.subr.mxu0 0.0
        %990 = vmatpush1.msra.mxu0 0.0
        %991 = vmatprep.subr.mxu0 0.0
        %992 = vmatpush1.msra.mxu0 0.0
        %993 = vmatprep.subr.mxu0 0.0
        %994 = vmatpush1.msra.mxu0 0.0
        %995 = vmatprep.subr.mxu0 0.0
        %996 = vmatpush1.msra.mxu0 0.0
        %997 = vmatprep.subr.mxu0 0.0
        %998 = vmatpush1.msra.mxu0 0.0
        %999 = vmatprep.subr.mxu0 0.0
        %1000 = vmatpush1.msra.mxu0 0.0
        %1001 = vmatprep.subr.mxu0 0.0
        %1002 = vmatpush1.msra.mxu0 0.0
        %1003 = vmatprep.subr.mxu0 0.0
        %1004 = vmatpush1.msra.mxu0 0.0
        %1005 = vmatprep.subr.mxu0 0.0
        %1006 = vmatpush1.msra.mxu0 0.0
        %1007 = vmatprep.subr.mxu0 0.0
        %1008 = vmatpush1.msra.mxu0 0.0
        %1009 = vmatprep.subr.mxu0 0.0
        %1010 = vmatpush1.msra.mxu0 0.0
        %1011 = vmatprep.subr.mxu0 0.0
        %1012 = vmatpush1.msra.mxu0 0.0
        %1013 = vmatprep.subr.mxu0 0.0
        %1014 = vmatpush1.msra.mxu0 0.0
        %1015 = vmatprep.subr.mxu0 0.0
        %1016 = vmatpush1.msra.mxu0 0.0
        %1017 = vmatprep.mubr.f32.mxu0 0.0
        %1018 = vmatmul.mubr.f32.gmra.mrb[0].mxu0 %v880
        %v1019 = vpop.f32.mrb[0].mxu0
        %v1020 = vadd.f32 0.0, %v1019
        %v1021 = vpop.f32.mrb[0].mxu0
        %v1022 = vadd.f32 0.0, %v1021
        %1023 = vdwg.mxu0
        %1024 = vmatprep.subr.mxu0 %v868
        %1025 = vmatpush1.msra.mxu0 %v867
        %1026 = vmatprep.subr.mxu0 %v876
        %1027 = vmatpush1.msra.mxu0 %v875
        %1028 = vmatprep.subr.mxu0 0.0
        %1029 = vmatpush1.msra.mxu0 0.0
        %1030 = vmatprep.subr.mxu0 0.0
        %1031 = vmatpush1.msra.mxu0 0.0
        %1032 = vmatprep.subr.mxu0 0.0
        %1033 = vmatpush1.msra.mxu0 0.0
        %1034 = vmatprep.subr.mxu0 0.0
        %1035 = vmatpush1.msra.mxu0 0.0
        %1036 = vmatprep.subr.mxu0 0.0
        %1037 = vmatpush1.msra.mxu0 0.0
        %1038 = vmatprep.subr.mxu0 0.0
        %1039 = vmatpush1.msra.mxu0 0.0
        %1040 = vmatprep.subr.mxu0 0.0
        %1041 = vmatpush1.msra.mxu0 0.0
        %1042 = vmatprep.subr.mxu0 0.0
        %1043 = vmatpush1.msra.mxu0 0.0
        %1044 = vmatprep.subr.mxu0 0.0
        %1045 = vmatpush1.msra.mxu0 0.0
        %1046 = vmatprep.subr.mxu0 0.0
        %1047 = vmatpush1.msra.mxu0 0.0
        %1048 = vmatprep.subr.mxu0 0.0
        %1049 = vmatpush1.msra.mxu0 0.0
        %1050 = vmatprep.subr.mxu0 0.0
        %1051 = vmatpush1.msra.mxu0 0.0
        %1052 = vmatprep.subr.mxu0 0.0
        %1053 = vmatpush1.msra.mxu0 0.0
        %1054 = vmatprep.subr.mxu0 0.0
        %1055 = vmatpush1.msra.mxu0 0.0
        %1056 = vmatprep.subr.mxu0 0.0
        %1057 = vmatpush1.msra.mxu0 0.0
        %1058 = vmatprep.subr.mxu0 0.0
        %1059 = vmatpush1.msra.mxu0 0.0
        %1060 = vmatprep.subr.mxu0 0.0
        %1061 = vmatpush1.msra.mxu0 0.0
        %1062 = vmatprep.subr.mxu0 0.0
        %1063 = vmatpush1.msra.mxu0 0.0
        %1064 = vmatprep.subr.mxu0 0.0
        %1065 = vmatpush1.msra.mxu0 0.0
        %1066 = vmatprep.subr.mxu0 0.0
        %1067 = vmatpush1.msra.mxu0 0.0
        %1068 = vmatprep.subr.mxu0 0.0
        %1069 = vmatpush1.msra.mxu0 0.0
        %1070 = vmatprep.subr.mxu0 0.0
        %1071 = vmatpush1.msra.mxu0 0.0
        %1072 = vmatprep.subr.mxu0 0.0
        %1073 = vmatpush1.msra.mxu0 0.0
        %1074 = vmatprep.subr.mxu0 0.0
        %1075 = vmatpush1.msra.mxu0 0.0
        %1076 = vmatprep.subr.mxu0 0.0
        %1077 = vmatpush1.msra.mxu0 0.0
        %1078 = vmatprep.subr.mxu0 0.0
        %1079 = vmatpush1.msra.mxu0 0.0
        %1080 = vmatprep.subr.mxu0 0.0
        %1081 = vmatpush1.msra.mxu0 0.0
        %1082 = vmatprep.subr.mxu0 0.0
        %1083 = vmatpush1.msra.mxu0 0.0
        %1084 = vmatprep.subr.mxu0 0.0
        %1085 = vmatpush1.msra.mxu0 0.0
        %1086 = vmatprep.subr.mxu0 0.0
        %1087 = vmatpush1.msra.mxu0 0.0
        %1088 = vmatprep.mubr.f32.mxu0 0.0
        %1089 = vmatmul.mubr.f32.gmra.mrb[0].mxu0 %v880
        %v1090 = vpop.f32.mrb[0].mxu0
        %v1091 = vadd.f32 0.0, %v1090
        %v1092 = vpop.f32.mrb[0].mxu0
        %v1093 = vadd.f32 0.0, %v1092
        %1094 = vdwg.mxu0
        %1095 = vmatprep.subr.mxu0 %v870
        %1096 = vmatpush1.msra.mxu0 %v869
        %1097 = vmatprep.subr.mxu0 %v878
        %1098 = vmatpush1.msra.mxu0 %v877
        %1099 = vmatprep.subr.mxu0 0.0
        %1100 = vmatpush1.msra.mxu0 0.0
        %1101 = vmatprep.subr.mxu0 0.0
        %1102 = vmatpush1.msra.mxu0 0.0
        %1103 = vmatprep.subr.mxu0 0.0
        %1104 = vmatpush1.msra.mxu0 0.0
        %1105 = vmatprep.subr.mxu0 0.0
        %1106 = vmatpush1.msra.mxu0 0.0
        %1107 = vmatprep.subr.mxu0 0.0
        %1108 = vmatpush1.msra.mxu0 0.0
        %1109 = vmatprep.subr.mxu0 0.0
        %1110 = vmatpush1.msra.mxu0 0.0
        %1111 = vmatprep.subr.mxu0 0.0
        %1112 = vmatpush1.msra.mxu0 0.0
        %1113 = vmatprep.subr.mxu0 0.0
        %1114 = vmatpush1.msra.mxu0 0.0
        %1115 = vmatprep.subr.mxu0 0.0
        %1116 = vmatpush1.msra.mxu0 0.0
        %1117 = vmatprep.subr.mxu0 0.0
        %1118 = vmatpush1.msra.mxu0 0.0
        %1119 = vmatprep.subr.mxu0 0.0
        %1120 = vmatpush1.msra.mxu0 0.0
        %1121 = vmatprep.subr.mxu0 0.0
        %1122 = vmatpush1.msra.mxu0 0.0
        %1123 = vmatprep.subr.mxu0 0.0
        %1124 = vmatpush1.msra.mxu0 0.0
        %1125 = vmatprep.subr.mxu0 0.0
        %1126 = vmatpush1.msra.mxu0 0.0
        %1127 = vmatprep.subr.mxu0 0.0
        %1128 = vmatpush1.msra.mxu0 0.0
        %1129 = vmatprep.subr.mxu0 0.0
        %1130 = vmatpush1.msra.mxu0 0.0
        %1131 = vmatprep.subr.mxu0 0.0
        %1132 = vmatpush1.msra.mxu0 0.0
        %1133 = vmatprep.subr.mxu0 0.0
        %1134 = vmatpush1.msra.mxu0 0.0
        %1135 = vmatprep.subr.mxu0 0.0
        %1136 = vmatpush1.msra.mxu0 0.0
        %1137 = vmatprep.subr.mxu0 0.0
        %1138 = vmatpush1.msra.mxu0 0.0
        %1139 = vmatprep.subr.mxu0 0.0
        %1140 = vmatpush1.msra.mxu0 0.0
        %1141 = vmatprep.subr.mxu0 0.0
        %1142 = vmatpush1.msra.mxu0 0.0
        %1143 = vmatprep.subr.mxu0 0.0
        %1144 = vmatpush1.msra.mxu0 0.0
        %1145 = vmatprep.subr.mxu0 0.0
        %1146 = vmatpush1.msra.mxu0 0.0
        %1147 = vmatprep.subr.mxu0 0.0
        %1148 = vmatpush1.msra.mxu0 0.0
        %1149 = vmatprep.subr.mxu0 0.0
        %1150 = vmatpush1.msra.mxu0 0.0
        %1151 = vmatprep.subr.mxu0 0.0
        %1152 = vmatpush1.msra.mxu0 0.0
        %1153 = vmatprep.subr.mxu0 0.0
        %1154 = vmatpush1.msra.mxu0 0.0
        %1155 = vmatprep.subr.mxu0 0.0
        %1156 = vmatpush1.msra.mxu0 0.0
        %1157 = vmatprep.subr.mxu0 0.0
        %1158 = vmatpush1.msra.mxu0 0.0
        %1159 = vmatprep.mubr.f32.mxu0 0.0
        %1160 = vmatmul.mubr.f32.gmra.mrb[0].mxu0 %v880
        %v1161 = vpop.f32.mrb[0].mxu0
        %v1162 = vadd.f32 0.0, %v1161
        %v1163 = vpop.f32.mrb[0].mxu0
        %v1164 = vadd.f32 0.0, %v1163
        %1165 = vdwg.mxu0
        %v1166 = vmul.f32 %v277, %v949
        %v1167 = vmul.f32 %v278, %v951
        %v1168 = vmul.f32 %v279, %v1020
        %v1169 = vmul.f32 %v280, %v1022
        %v1170 = vmul.f32 %v281, %v1091
        %v1171 = vmul.f32 %v282, %v1093
        %v1172 = vmul.f32 %v283, %v1162
        %v1173 = vmul.f32 %v284, %v1164
        %1174 = vst [vmem:[%s271] sm:$0xff] %v1166
        %1175 = vst [vmem:[%s271 + $0x8] sm:$0xff] %v1167
        %1176 = vst [vmem:[%s271 + $0x10] sm:$0xff] %v1168
        %1177 = vst [vmem:[%s271 + $0x18] sm:$0xff] %v1169
        %1178 = vst [vmem:[%s271 + $0x20] sm:$0xff] %v1170
        %1179 = vst [vmem:[%s271 + $0x28] sm:$0xff] %v1171
        %1180 = vst [vmem:[%s271 + $0x30] sm:$0xff] %v1172
        %1181 = vst [vmem:[%s271 + $0x38] sm:$0xff] %v1173
        %s1182 = sand.u32 %s181, 1
        %s1183 = scalar_lea.sflag [#allocation3], %s1182
        %s1184 = sand.u32 %s181, 1
        %s1185 = smul.addr %s1184, 64
        %s1186 = scalar_lea.vmem [#allocation2], %s1185
        // Predicated region
        $region49: #{tpu_custom_call.1} parent=47 // pred_check
          %p1187 = pneg %p191
        $region50: #{tpu_custom_call.1} parent=47 // pred_check_branch
          %1189 = sbr.rel (%p1187) target = $region52
        $region51: #{tpu_custom_call.1} parent=47 // pred_region
          %s1191 = ssub.s32 1024, 1024
          %1192 = vsyncadd %s1183, %s1191
          %s1193 = smul.addr %s21, 8
          %s1194 = smul.addr %s1193, 128
          %s1195 = scalar_lea.hbm %s7, %s1194
          %s1197 = sshll.u32 %s1186, 4
          %s1198 = int_to_ptr.vmem [resolvable:$true] %s1197
          %1200 = dma.vmem_to_hbm [thread:$0]  %s1198, 1024, %s1195, %s1183
        $region52: #{tpu_custom_call.1} parent=47 // pred_fallthru
          _
      $region48: #{tpu_custom_call.1} parent=5 // pred_fallthru
        _
      %p1201 = scmp.le.s32.totalorder 2, %s16
      // Predicated region
      $region53: #{tpu_custom_call.1} parent=5 // pred_check
        %p1202 = pneg %p1201
      $region54: #{tpu_custom_call.1} parent=5 // pred_check_branch
        %1204 = sbr.rel (%p1202) target = $region56
      $region55: #{tpu_custom_call.1} parent=5 // pred_region
        %s1205 = ssub.s32 %s16, 2
        // Predicated region
        $region57: #{tpu_custom_call.1} parent=55 // pred_check
          %p1206 = pneg %p197
        $region58: #{tpu_custom_call.1} parent=55 // pred_check_branch
          %1208 = sbr.rel (%p1206) target = $region60
        $region59: #{tpu_custom_call.1} parent=55 // pred_region
          %s1209 = sand.u32 %s182, 1
          %s1210 = scalar_lea.sflag [#allocation3], %s1209
          %s1211 = sand.u32 %s182, 1
          %s1212 = smul.addr %s1211, 64
          %s1213 = scalar_lea.vmem [#allocation2], %s1212
          %1214 = dma.done %s1210, 1024
        $region60: #{tpu_custom_call.1} parent=55 // pred_fallthru
          _
      $region56: #{tpu_custom_call.1} parent=5 // pred_fallthru
        _
    $region6: #{tpu_custom_call.1} parent=1 // loop_footer
      %s20 = sadd.s32 1, %s16
    $region7: #{tpu_custom_call.1} parent=1 // loop_footer_branch
      %15 = sbr.rel target = $region3
    $region8: #{tpu_custom_call.1} parent=1 // loop_exit
      _
    %1215 = vsyncpa [#allocation3], 1
    %s1216 = scalar_lea.sflag [#allocation3], 1
    %1217 = vsyncpa %s1216, 1

</llo_original>
